<compile_context>
chip_gen: v6e
topology: v6e:2x2x1
jax: 0.10.0
libtpu: 0.0.40
codegen_flags: <defaults>
</compile_context>

<pallas_src>
import functools
import math

import jax
import jax.numpy as jnp
from jax.experimental import pallas as pl
from jax.experimental.pallas import tpu as pltpu


def _round_up(a, b):
    return (a + b - 1) // b * b


def _lcm(a, b):
    return a * b // math.gcd(a, b)


# ----------------------------- Masked_features -----------------------------
def _make_noise_x(X, noise_mode, num_view, key):
    """Build noise_X for the final (only surviving) view.

    The key is split num_view times so the last view's key is identical to a
    naive per-view loop; the first num_view-1 views are dead work and skipped.
    """
    k = key
    kv = key
    for _ in range(num_view):
        k, kv = jax.random.split(k)
    if noise_mode == 0:
        # get_random_mask(severity=0.2): X * (1 - (rand < 0.2))
        mask = (jax.random.uniform(kv, X.shape) < 0.2).astype(X.dtype)
        return X * (1.0 - mask)
    else:
        # add_gaussian_noise(mean=0, std=0.2): X + randn * 0.2
        return X + jax.random.normal(kv, X.shape, X.dtype) * 0.2


# ------------------------------ fused kernel -------------------------------
def fused_kernel(adj_ref, nx_ref, o_ref, *, order):
    """Whole GCN recovery chain with everything resident in VMEM.

    h_{t+1} = (adj @ h_t) * (1 / max(||adj_i||, 1e-12)) + noise_X
    """
    a = adj_ref[...].astype(jnp.float32)
    nrm = jnp.sqrt(jnp.sum(a * a, axis=1, keepdims=True))
    inv = 1.0 / jnp.maximum(nrm, 1e-12)
    nx = nx_ref[...].astype(jnp.float32)
    h = nx
    for _ in range(order):  # `order` is a small static int -> unrolled
        h = jnp.dot(a, h, preferred_element_type=jnp.float32) * inv + nx
    o_ref[...] = h.astype(o_ref.dtype)


# ------------------------- tiled per-step kernel ---------------------------
def mp_step_kernel(adj_ref, h_ref, res_ref, o_ref, acc_ref, nrm_ref):
    """One step of h_new = normalize(adj, p=2, dim=1) @ h + noise_X.

    Tiled over (M row-block, K column-block). Row L2-norm-squares are
    accumulated alongside the matmul and folded into the output at the last
    K step instead of materializing a normalized copy of adj.
    """
    k = pl.program_id(1)

    @pl.when(k == 0)
    def _():
        acc_ref[...] = jnp.zeros_like(acc_ref)
        nrm_ref[...] = jnp.zeros_like(nrm_ref)

    a = adj_ref[...].astype(jnp.float32)
    acc_ref[...] += jnp.dot(
        a, h_ref[...].astype(jnp.float32), preferred_element_type=jnp.float32
    )
    nrm_ref[...] += jnp.sum(a * a, axis=1, keepdims=True)

    @pl.when(k == pl.num_programs(1) - 1)
    def _():
        # F.normalize eps handling: divide by max(||row||, 1e-12).
        inv = 1.0 / jnp.maximum(jnp.sqrt(nrm_ref[...]), 1e-12)
        o_ref[...] = (
            acc_ref[...] * inv + res_ref[...].astype(jnp.float32)
        ).astype(o_ref.dtype)


# --------------------------------- driver ----------------------------------
def _gcn_recovery_impl(X, adj_rec, key, *, noise_mode, num_view, order,
                       tm, tk, force_tiled):
    N, D = X.shape
    assert adj_rec.shape == (N, N)
    assert num_view >= 1

    # ---- noise (specialized on noise_mode, computed once, plain JAX) ------
    noise_x = _make_noise_x(X, noise_mode, num_view, key)

    itemsize = X.dtype.itemsize
    Dp = _round_up(D, 128)          # lane-dense feature dim

    # ======================= FUSED (VMEM-resident) path ====================
    Npf = _round_up(N, 128)
    fused_bytes = ((Npf * Npf + 2 * Npf * Dp) * itemsize
                   + (Npf * Npf + 3 * Npf * Dp) * 4)
    use_fused = (not force_tiled) and fused_bytes <= 16 * 1024 * 1024

    if use_fused:
        Np = Npf
        adj_p = jnp.pad(adj_rec, ((0, Np - N), (0, Np - N)))
        nx_p = jnp.pad(noise_x, ((0, Np - N), (0, Dp - D)))
        vmem_limit = int(min(56 * 1024 * 1024,
                             max(32 * 1024 * 1024, 3 * fused_bytes)))
        out = pl.pallas_call(
            functools.partial(fused_kernel, order=order),
            out_shape=jax.ShapeDtypeStruct((Np, Dp), X.dtype),
            in_specs=[
                pl.BlockSpec(memory_space=pltpu.MemorySpace.VMEM),
                pl.BlockSpec(memory_space=pltpu.MemorySpace.VMEM),
            ],
            out_specs=pl.BlockSpec(memory_space=pltpu.MemorySpace.VMEM),
            compiler_params=pltpu.CompilerParams(vmem_limit_bytes=vmem_limit),
            cost_estimate=pl.CostEstimate(
                flops=order * (2 * Np * Np * Dp + 2 * Np * Dp) + 3 * Np * Np,
                transcendentals=0,
                bytes_accessed=(Np * Np + 2 * Np * Dp) * itemsize,
            ),
        )(adj_p, nx_p)
        return out[:N, :D]

    # ============================ TILED path ===============================
    tm = _round_up(max(8, min(tm, _round_up(N, 8))), 8)
    tk = _round_up(max(128, min(tk, _round_up(N, 128))), 128)
    Np = _round_up(N, _lcm(tm, tk))

    adj_p = jnp.pad(adj_rec, ((0, Np - N), (0, Np - N)))
    nx_p = jnp.pad(noise_x, ((0, Np - N), (0, Dp - D)))

    # VMEM budget (double-buffered inputs/outputs + f32 scratch)
    tile_bytes = (
        2 * (tm * tk + tk * Dp + 2 * tm * Dp) * itemsize   # dbl-buffered tiles
        + (tm * Dp + tm * 8) * 4                            # f32 acc + norm
    )
    vmem_limit = int(min(56 * 1024 * 1024,
                         max(32 * 1024 * 1024, 4 * tile_bytes)))

    grid = (Np // tm, Np // tk)
    step = pl.pallas_call(
        mp_step_kernel,
        out_shape=jax.ShapeDtypeStruct((Np, Dp), X.dtype),
        grid_spec=pltpu.PrefetchScalarGridSpec(
            num_scalar_prefetch=0,
            grid=grid,
            in_specs=[
                pl.BlockSpec((tm, tk), lambda i, k: (i, k)),  # adj tile
                pl.BlockSpec((tk, Dp), lambda i, k: (k, 0)),  # previous h
                pl.BlockSpec((tm, Dp), lambda i, k: (i, 0)),  # residual noise_X
            ],
            out_specs=pl.BlockSpec((tm, Dp), lambda i, k: (i, 0)),
            scratch_shapes=[
                pltpu.VMEM((tm, Dp), jnp.float32),  # matmul accumulator
                pltpu.VMEM((tm, 1), jnp.float32),   # row ||adj||^2 accumulator
            ],
        ),
        compiler_params=pltpu.CompilerParams(
            dimension_semantics=("parallel", "arbitrary"),
            vmem_limit_bytes=vmem_limit,
        ),
        cost_estimate=pl.CostEstimate(
            flops=2 * Np * Np * Dp + 3 * Np * Np,
            transcendentals=0,
            bytes_accessed=(Np * Np + 3 * Np * Dp) * itemsize,
        ),
    )

    # message_passing_global: h = adj_n @ h + noise_X, `order` times.
    # Full previous h is needed each step -> one pallas_call per step,
    # h ping-ponged through HBM while each call stays fully pipelined.
    h = nx_p
    for _ in range(order):
        h = step(adj_p, h, nx_p)

    return h[:N, :D]


gcn_recovery = jax.jit(
    functools.partial(_gcn_recovery_impl, tm=256, tk=512, force_tiled=False),
    static_argnames=("noise_mode", "num_view", "order"),
)

# Forced-tiled entry point (exercises the large-graph path on small shapes).
gcn_recovery_tiled = jax.jit(
    functools.partial(_gcn_recovery_impl, tm=256, tk=512, force_tiled=True),
    static_argnames=("noise_mode", "num_view", "order"),
)


def _reference(adj_rec, noise_x, order):
    """Pure-JAX reference matching the PyTorch module (same noise_X)."""
    norm = jnp.sqrt(jnp.sum(adj_rec * adj_rec, axis=1, keepdims=True))
    adj_n = adj_rec / jnp.maximum(norm, 1e-12)
    h = noise_x
    for _ in range(order):
        h = adj_n @ h + noise_x
    return h


if __name__ == "__main__":
    # Small, module-consistent shapes: N=16 graph nodes, D=32 features.
    N, D = 16, 32

    key = jax.random.PRNGKey(0)
    kx, ka, kn = jax.random.split(key, 3)

    X = jax.random.normal(kx, (N, D), dtype=jnp.float32)
    adj_rec = jax.random.uniform(ka, (N, N), dtype=jnp.float32)

    # --- Path 1: fused VMEM-resident kernel, noise_mode=0 (random mask) ----
    num_view, order, noise_mode = 2, 3, 0
    out_f = gcn_recovery(
        X, adj_rec, kn, noise_mode=noise_mode, num_view=num_view, order=order
    )
    out_f = jax.block_until_ready(out_f)
    assert out_f.shape == (N, D)
    nx0 = _make_noise_x(X, noise_mode, num_view, kn)
    ref0 = _reference(adj_rec, nx0, order)
    assert jnp.allclose(out_f, ref0, rtol=1e-4, atol=1e-4), "fused path mismatch"

    # --- Path 2: tiled grid kernel (forced), noise_mode=1 (gaussian) -------
    num_view, order, noise_mode = 1, 2, 1
    out_t = gcn_recovery_tiled(
        X, adj_rec, kn, noise_mode=noise_mode, num_view=num_view, order=order
    )
    out_t = jax.block_until_ready(out_t)
    assert out_t.shape == (N, D)
    nx1 = _make_noise_x(X, noise_mode, num_view, kn)
    ref1 = _reference(adj_rec, nx1, order)
    assert jnp.allclose(out_t, ref1, rtol=1e-4, atol=1e-4), "tiled path mismatch"

    print("KERNEL_OK")
</pallas_src>

<mosaic_0001>
module attributes {stable_mosaic.version = 11 : i64} {
  func.func @fused_kernel(%arg0: memref<128x128xf32, #tpu.memory_space<vmem>>, %arg1: memref<128x128xf32, #tpu.memory_space<vmem>>, %arg2: memref<128x128xf32, #tpu.memory_space<vmem>>) attributes {dimension_semantics = [], scalar_prefetch = 0 : i64, scratch_operands = 0 : i64, tpu.core_type = #tpu.core_type<tc>} {
    %c0 = arith.constant 0 : index
    %c0_0 = arith.constant 0 : index
    %0 = vector.load %arg0[%c0, %c0_0] : memref<128x128xf32, #tpu.memory_space<vmem>>, vector<128x128xf32>
    %1 = arith.mulf %0, %0 : vector<128x128xf32>
    %cst = arith.constant dense<0.000000e+00> : vector<128xf32>
    %2 = vector.multi_reduction <add>, %1, %cst [1] : vector<128x128xf32> to vector<128xf32>
    %3 = vector.shape_cast %2 : vector<128xf32> to vector<128x1xf32>
    %4 = math.sqrt %3 : vector<128x1xf32>
    %cst_1 = arith.constant 9.99999996E-13 : f32
    %5 = vector.broadcast %cst_1 : f32 to vector<128x1xf32>
    %6 = arith.maximumf %4, %5 : vector<128x1xf32>
    %cst_2 = arith.constant 1.000000e+00 : f32
    %7 = vector.broadcast %cst_2 : f32 to vector<128x1xf32>
    %8 = arith.divf %7, %6 : vector<128x1xf32>
    %c0_3 = arith.constant 0 : index
    %c0_4 = arith.constant 0 : index
    %9 = vector.load %arg1[%c0_3, %c0_4] : memref<128x128xf32, #tpu.memory_space<vmem>>, vector<128x128xf32>
    %cst_5 = arith.constant dense<0.000000e+00> : vector<128x128xf32>
    %10 = tpu.matmul %0, %9, %cst_5 {dimension_numbers = #tpu.dot_dimension_numbers<[1], [0], [0], [1], [0, 0, 1, 1], [], []>} : vector<128x128xf32>, vector<128x128xf32>, vector<128x128xf32> -> vector<128x128xf32>
    %11 = vector.broadcast %8 : vector<128x1xf32> to vector<128x128xf32>
    %12 = arith.mulf %10, %11 : vector<128x128xf32>
    %13 = arith.addf %12, %9 : vector<128x128xf32>
    %cst_6 = arith.constant dense<0.000000e+00> : vector<128x128xf32>
    %14 = tpu.matmul %0, %13, %cst_6 {dimension_numbers = #tpu.dot_dimension_numbers<[1], [0], [0], [1], [0, 0, 1, 1], [], []>} : vector<128x128xf32>, vector<128x128xf32>, vector<128x128xf32> -> vector<128x128xf32>
    %15 = vector.broadcast %8 : vector<128x1xf32> to vector<128x128xf32>
    %16 = arith.mulf %14, %15 : vector<128x128xf32>
    %17 = arith.addf %16, %9 : vector<128x128xf32>
    %cst_7 = arith.constant dense<0.000000e+00> : vector<128x128xf32>
    %18 = tpu.matmul %0, %17, %cst_7 {dimension_numbers = #tpu.dot_dimension_numbers<[1], [0], [0], [1], [0, 0, 1, 1], [], []>} : vector<128x128xf32>, vector<128x128xf32>, vector<128x128xf32> -> vector<128x128xf32>
    %19 = vector.broadcast %8 : vector<128x1xf32> to vector<128x128xf32>
    %20 = arith.mulf %18, %19 : vector<128x128xf32>
    %21 = arith.addf %20, %9 : vector<128x128xf32>
    %c0_8 = arith.constant 0 : index
    %c0_9 = arith.constant 0 : index
    %22 = vector.load %arg2[%c0_8, %c0_9] : memref<128x128xf32, #tpu.memory_space<vmem>>, vector<128x128xf32>
    tpu.vector_store %arg2[%c0_8, %c0_9], %21 {strides = array<i32>} : memref<128x128xf32, #tpu.memory_space<vmem>>, vector<128x128xf32>,
    return
  }
}

</mosaic_0001>

<llo_original>
// kernel: _gcn_recovery_impl.1
$region0: #{_gcn_recovery_impl.1}
  #allocation0 [shape = 'u32[]', space=smem, size = 0x4, offset = 0x4, fixed_abs, tag = 'smem constant byte address 0x4 - core index']
  #allocation1 [shape = 'u32[144,128]{1,0:T(1,128)}', space=vmem, size = 0x12000, scoped, tag = 'internal scratch']
  %s0 = inlined_call_operand.vmem [shape: f32[128,128], index: 0, kind: input, shape index: {}]
  %s1 = inlined_call_operand.vmem [shape: f32[128,128], index: 1, kind: input, shape index: {}]
  %s2 = inlined_call_operand.vmem [shape: f32[128,128], index: 2, kind: output, shape index: {}]
  %s3 = sld [smem:[#allocation0]]
  $region18: #{_gcn_recovery_impl.1} parent=0
    _
  %s5 = ssub.s32 1, %s3
  %s6 = scalar_select 0, %s5, %s3
  // Predicated region
  $region2: #{_gcn_recovery_impl.1} parent=0 // pred_check
    _
  $region3: #{_gcn_recovery_impl.1} parent=0 // pred_check_branch
    %8 = sbr.rel (0) target = $region5
  $region4: #{_gcn_recovery_impl.1} parent=0 // pred_region
    _
  $region5: #{_gcn_recovery_impl.1} parent=0 // pred_fallthru
    _
  // Predicated region
  $region6: #{_gcn_recovery_impl.1} parent=0 // pred_check
    _
  $region7: #{_gcn_recovery_impl.1} parent=0 // pred_check_branch
    %10 = sbr.rel (0) target = $region9
  $region8: #{_gcn_recovery_impl.1} parent=0 // pred_region
    _
  $region9: #{_gcn_recovery_impl.1} parent=0 // pred_fallthru
    _
  %v11 = vld [vmem:[%s0] sm:$0xff]
  %v12 = vld [vmem:[%s0 + $0x8] sm:$0xff]
  %v13 = vld [vmem:[%s0 + $0x10] sm:$0xff]
  %v14 = vld [vmem:[%s0 + $0x18] sm:$0xff]
  %v15 = vld [vmem:[%s0 + $0x20] sm:$0xff]
  %v16 = vld [vmem:[%s0 + $0x28] sm:$0xff]
  %v17 = vld [vmem:[%s0 + $0x30] sm:$0xff]
  %v18 = vld [vmem:[%s0 + $0x38] sm:$0xff]
  %v19 = vld [vmem:[%s0 + $0x40] sm:$0xff]
  %v20 = vld [vmem:[%s0 + $0x48] sm:$0xff]
  %v21 = vld [vmem:[%s0 + $0x50] sm:$0xff]
  %v22 = vld [vmem:[%s0 + $0x58] sm:$0xff]
  %v23 = vld [vmem:[%s0 + $0x60] sm:$0xff]
  %v24 = vld [vmem:[%s0 + $0x68] sm:$0xff]
  %v25 = vld [vmem:[%s0 + $0x70] sm:$0xff]
  %v26 = vld [vmem:[%s0 + $0x78] sm:$0xff]
  %v27 = vmul.f32 %v11, %v11
  %v28 = vmul.f32 %v12, %v12
  %v29 = vmul.f32 %v13, %v13
  %v30 = vmul.f32 %v14, %v14
  %v31 = vmul.f32 %v15, %v15
  %v32 = vmul.f32 %v16, %v16
  %v33 = vmul.f32 %v17, %v17
  %v34 = vmul.f32 %v18, %v18
  %v35 = vmul.f32 %v19, %v19
  %v36 = vmul.f32 %v20, %v20
  %v37 = vmul.f32 %v21, %v21
  %v38 = vmul.f32 %v22, %v22
  %v39 = vmul.f32 %v23, %v23
  %v40 = vmul.f32 %v24, %v24
  %v41 = vmul.f32 %v25, %v25
  %v42 = vmul.f32 %v26, %v26
  %43 = vadd.xlane.f32.xlu0 %v27
  %v44 = vpop.xlane.xlu0 %43
  %45 = vadd.xlane.f32.xlu0 %v28
  %v46 = vpop.xlane.xlu0 %45
  %47 = vadd.xlane.f32.xlu0 %v29
  %v48 = vpop.xlane.xlu0 %47
  %49 = vadd.xlane.f32.xlu0 %v30
  %v50 = vpop.xlane.xlu0 %49
  %51 = vadd.xlane.f32.xlu0 %v31
  %v52 = vpop.xlane.xlu0 %51
  %53 = vadd.xlane.f32.xlu0 %v32
  %v54 = vpop.xlane.xlu0 %53
  %55 = vadd.xlane.f32.xlu0 %v33
  %v56 = vpop.xlane.xlu0 %55
  %57 = vadd.xlane.f32.xlu0 %v34
  %v58 = vpop.xlane.xlu0 %57
  %59 = vadd.xlane.f32.xlu0 %v35
  %v60 = vpop.xlane.xlu0 %59
  %61 = vadd.xlane.f32.xlu0 %v36
  %v62 = vpop.xlane.xlu0 %61
  %63 = vadd.xlane.f32.xlu0 %v37
  %v64 = vpop.xlane.xlu0 %63
  %65 = vadd.xlane.f32.xlu0 %v38
  %v66 = vpop.xlane.xlu0 %65
  %67 = vadd.xlane.f32.xlu0 %v39
  %v68 = vpop.xlane.xlu0 %67
  %69 = vadd.xlane.f32.xlu0 %v40
  %v70 = vpop.xlane.xlu0 %69
  %71 = vadd.xlane.f32.xlu0 %v41
  %v72 = vpop.xlane.xlu0 %71
  %73 = vadd.xlane.f32.xlu0 %v42
  %v74 = vpop.xlane.xlu0 %73
  %v75 = vrsqrt.pop %v44
  %v76 = vmul.f32 %v44, %v75
  %vm77 = vcmp.eq.f32.partialorder %v44, inf
  %v78 = vsel %vm77, %v44, %v76
  %vm79 = vcmp.eq.f32.partialorder %v44, 0.0
  %v80 = vand.u32 %v44, 2147483648
  %v81 = vsel %vm79, %v80, %v78
  %v82 = vrsqrt.pop %v46
  %v83 = vmul.f32 %v46, %v82
  %vm84 = vcmp.eq.f32.partialorder %v46, inf
  %v85 = vsel %vm84, %v46, %v83
  %vm86 = vcmp.eq.f32.partialorder %v46, 0.0
  %v87 = vand.u32 %v46, 2147483648
  %v88 = vsel %vm86, %v87, %v85
  %v89 = vrsqrt.pop %v48
  %v90 = vmul.f32 %v48, %v89
  %vm91 = vcmp.eq.f32.partialorder %v48, inf
  %v92 = vsel %vm91, %v48, %v90
  %vm93 = vcmp.eq.f32.partialorder %v48, 0.0
  %v94 = vand.u32 %v48, 2147483648
  %v95 = vsel %vm93, %v94, %v92
  %v96 = vrsqrt.pop %v50
  %v97 = vmul.f32 %v50, %v96
  %vm98 = vcmp.eq.f32.partialorder %v50, inf
  %v99 = vsel %vm98, %v50, %v97
  %vm100 = vcmp.eq.f32.partialorder %v50, 0.0
  %v101 = vand.u32 %v50, 2147483648
  %v102 = vsel %vm100, %v101, %v99
  %v103 = vrsqrt.pop %v52
  %v104 = vmul.f32 %v52, %v103
  %vm105 = vcmp.eq.f32.partialorder %v52, inf
  %v106 = vsel %vm105, %v52, %v104
  %vm107 = vcmp.eq.f32.partialorder %v52, 0.0
  %v108 = vand.u32 %v52, 2147483648
  %v109 = vsel %vm107, %v108, %v106
  %v110 = vrsqrt.pop %v54
  %v111 = vmul.f32 %v54, %v110
  %vm112 = vcmp.eq.f32.partialorder %v54, inf
  %v113 = vsel %vm112, %v54, %v111
  %vm114 = vcmp.eq.f32.partialorder %v54, 0.0
  %v115 = vand.u32 %v54, 2147483648
  %v116 = vsel %vm114, %v115, %v113
  %v117 = vrsqrt.pop %v56
  %v118 = vmul.f32 %v56, %v117
  %vm119 = vcmp.eq.f32.partialorder %v56, inf
  %v120 = vsel %vm119, %v56, %v118
  %vm121 = vcmp.eq.f32.partialorder %v56, 0.0
  %v122 = vand.u32 %v56, 2147483648
  %v123 = vsel %vm121, %v122, %v120
  %v124 = vrsqrt.pop %v58
  %v125 = vmul.f32 %v58, %v124
  %vm126 = vcmp.eq.f32.partialorder %v58, inf
  %v127 = vsel %vm126, %v58, %v125
  %vm128 = vcmp.eq.f32.partialorder %v58, 0.0
  %v129 = vand.u32 %v58, 2147483648
  %v130 = vsel %vm128, %v129, %v127
  %v131 = vrsqrt.pop %v60
  %v132 = vmul.f32 %v60, %v131
  %vm133 = vcmp.eq.f32.partialorder %v60, inf
  %v134 = vsel %vm133, %v60, %v132
  %vm135 = vcmp.eq.f32.partialorder %v60, 0.0
  %v136 = vand.u32 %v60, 2147483648
  %v137 = vsel %vm135, %v136, %v134
  %v138 = vrsqrt.pop %v62
  %v139 = vmul.f32 %v62, %v138
  %vm140 = vcmp.eq.f32.partialorder %v62, inf
  %v141 = vsel %vm140, %v62, %v139
  %vm142 = vcmp.eq.f32.partialorder %v62, 0.0
  %v143 = vand.u32 %v62, 2147483648
  %v144 = vsel %vm142, %v143, %v141
  %v145 = vrsqrt.pop %v64
  %v146 = vmul.f32 %v64, %v145
  %vm147 = vcmp.eq.f32.partialorder %v64, inf
  %v148 = vsel %vm147, %v64, %v146
  %vm149 = vcmp.eq.f32.partialorder %v64, 0.0
  %v150 = vand.u32 %v64, 2147483648
  %v151 = vsel %vm149, %v150, %v148
  %v152 = vrsqrt.pop %v66
  %v153 = vmul.f32 %v66, %v152
  %vm154 = vcmp.eq.f32.partialorder %v66, inf
  %v155 = vsel %vm154, %v66, %v153
  %vm156 = vcmp.eq.f32.partialorder %v66, 0.0
  %v157 = vand.u32 %v66, 2147483648
  %v158 = vsel %vm156, %v157, %v155
  %v159 = vrsqrt.pop %v68
  %v160 = vmul.f32 %v68, %v159
  %vm161 = vcmp.eq.f32.partialorder %v68, inf
  %v162 = vsel %vm161, %v68, %v160
  %vm163 = vcmp.eq.f32.partialorder %v68, 0.0
  %v164 = vand.u32 %v68, 2147483648
  %v165 = vsel %vm163, %v164, %v162
  %v166 = vrsqrt.pop %v70
  %v167 = vmul.f32 %v70, %v166
  %vm168 = vcmp.eq.f32.partialorder %v70, inf
  %v169 = vsel %vm168, %v70, %v167
  %vm170 = vcmp.eq.f32.partialorder %v70, 0.0
  %v171 = vand.u32 %v70, 2147483648
  %v172 = vsel %vm170, %v171, %v169
  %v173 = vrsqrt.pop %v72
  %v174 = vmul.f32 %v72, %v173
  %vm175 = vcmp.eq.f32.partialorder %v72, inf
  %v176 = vsel %vm175, %v72, %v174
  %vm177 = vcmp.eq.f32.partialorder %v72, 0.0
  %v178 = vand.u32 %v72, 2147483648
  %v179 = vsel %vm177, %v178, %v176
  %v180 = vrsqrt.pop %v74
  %v181 = vmul.f32 %v74, %v180
  %vm182 = vcmp.eq.f32.partialorder %v74, inf
  %v183 = vsel %vm182, %v74, %v181
  %vm184 = vcmp.eq.f32.partialorder %v74, 0.0
  %v185 = vand.u32 %v74, 2147483648
  %v186 = vsel %vm184, %v185, %v183
  %v187 = vmax.f32 %v81, 1e-12
  %v188 = vmax.f32 %v88, 1e-12
  %v189 = vmax.f32 %v95, 1e-12
  %v190 = vmax.f32 %v102, 1e-12
  %v191 = vmax.f32 %v109, 1e-12
  %v192 = vmax.f32 %v116, 1e-12
  %v193 = vmax.f32 %v123, 1e-12
  %v194 = vmax.f32 %v130, 1e-12
  %v195 = vmax.f32 %v137, 1e-12
  %v196 = vmax.f32 %v144, 1e-12
  %v197 = vmax.f32 %v151, 1e-12
  %v198 = vmax.f32 %v158, 1e-12
  %v199 = vmax.f32 %v165, 1e-12
  %v200 = vmax.f32 %v172, 1e-12
  %v201 = vmax.f32 %v179, 1e-12
  %v202 = vmax.f32 %v186, 1e-12
  %v203 = vrcp.pop %v187
  %v204 = vmul.f32 1.0, %v203
  %v205 = vrcp.pop %v188
  %v206 = vmul.f32 1.0, %v205
  %v207 = vrcp.pop %v189
  %v208 = vmul.f32 1.0, %v207
  %v209 = vrcp.pop %v190
  %v210 = vmul.f32 1.0, %v209
  %v211 = vrcp.pop %v191
  %v212 = vmul.f32 1.0, %v211
  %v213 = vrcp.pop %v192
  %v214 = vmul.f32 1.0, %v213
  %v215 = vrcp.pop %v193
  %v216 = vmul.f32 1.0, %v215
  %v217 = vrcp.pop %v194
  %v218 = vmul.f32 1.0, %v217
  %v219 = vrcp.pop %v195
  %v220 = vmul.f32 1.0, %v219
  %v221 = vrcp.pop %v196
  %v222 = vmul.f32 1.0, %v221
  %v223 = vrcp.pop %v197
  %v224 = vmul.f32 1.0, %v223
  %v225 = vrcp.pop %v198
  %v226 = vmul.f32 1.0, %v225
  %v227 = vrcp.pop %v199
  %v228 = vmul.f32 1.0, %v227
  %v229 = vrcp.pop %v200
  %v230 = vmul.f32 1.0, %v229
  %v231 = vrcp.pop %v201
  %v232 = vmul.f32 1.0, %v231
  %v233 = vrcp.pop %v202
  %v234 = vmul.f32 1.0, %v233
  %v235 = vld [vmem:[%s1] sm:$0xff]
  %v236 = vld [vmem:[%s1 + $0x8] sm:$0xff]
  %v237 = vld [vmem:[%s1 + $0x10] sm:$0xff]
  %v238 = vld [vmem:[%s1 + $0x18] sm:$0xff]
  %v239 = vld [vmem:[%s1 + $0x20] sm:$0xff]
  %v240 = vld [vmem:[%s1 + $0x28] sm:$0xff]
  %v241 = vld [vmem:[%s1 + $0x30] sm:$0xff]
  %v242 = vld [vmem:[%s1 + $0x38] sm:$0xff]
  %v243 = vld [vmem:[%s1 + $0x40] sm:$0xff]
  %v244 = vld [vmem:[%s1 + $0x48] sm:$0xff]
  %v245 = vld [vmem:[%s1 + $0x50] sm:$0xff]
  %v246 = vld [vmem:[%s1 + $0x58] sm:$0xff]
  %v247 = vld [vmem:[%s1 + $0x60] sm:$0xff]
  %v248 = vld [vmem:[%s1 + $0x68] sm:$0xff]
  %v249 = vld [vmem:[%s1 + $0x70] sm:$0xff]
  %v250 = vld [vmem:[%s1 + $0x78] sm:$0xff]
  %251 = vmatprep.subr.mxu0 0.0
  %252 = vmatpush1.msra.mxu0 %v250
  %253 = vmatprep.subr.mxu0 0.0
  %254 = vmatpush1.msra.mxu0 %v249
  %255 = vmatprep.subr.mxu0 0.0
  %256 = vmatpush1.msra.mxu0 %v248
  %257 = vmatprep.subr.mxu0 0.0
  %258 = vmatpush1.msra.mxu0 %v247
  %259 = vmatprep.subr.mxu0 0.0
  %260 = vmatpush1.msra.mxu0 %v246
  %261 = vmatprep.subr.mxu0 0.0
  %262 = vmatpush1.msra.mxu0 %v245
  %263 = vmatprep.subr.mxu0 0.0
  %264 = vmatpush1.msra.mxu0 %v244
  %265 = vmatprep.subr.mxu0 0.0
  %266 = vmatpush1.msra.mxu0 %v243
  %267 = vmatprep.subr.mxu0 0.0
  %268 = vmatpush1.msra.mxu0 %v242
  %269 = vmatprep.subr.mxu0 0.0
  %270 = vmatpush1.msra.mxu0 %v241
  %271 = vmatprep.subr.mxu0 0.0
  %272 = vmatpush1.msra.mxu0 %v240
  %273 = vmatprep.subr.mxu0 0.0
  %274 = vmatpush1.msra.mxu0 %v239
  %275 = vmatprep.subr.mxu0 0.0
  %276 = vmatpush1.msra.mxu0 %v238
  %277 = vmatprep.subr.mxu0 0.0
  %278 = vmatpush1.msra.mxu0 %v237
  %279 = vmatprep.subr.mxu0 0.0
  %280 = vmatpush1.msra.mxu0 %v236
  %281 = vmatprep.subr.mxu0 0.0
  %282 = vmatpush1.msra.mxu0 %v235
  %283 = vmatprep.subr.mxu0 0.0
  %284 = vmatpush2.msra.mxu0 0.0
  %285 = vmatprep.subr.mxu0 0.0
  %286 = vmatpush2.msra.mxu0 0.0
  %287 = vmatprep.subr.mxu0 0.0
  %288 = vmatpush2.msra.mxu0 0.0
  %289 = vmatprep.subr.mxu0 0.0
  %290 = vmatpush2.msra.mxu0 0.0
  %291 = vmatprep.subr.mxu0 0.0
  %292 = vmatpush2.msra.mxu0 0.0
  %293 = vmatprep.subr.mxu0 0.0
  %294 = vmatpush2.msra.mxu0 0.0
  %295 = vmatprep.subr.mxu0 0.0
  %296 = vmatpush2.msra.mxu0 0.0
  %297 = vmatprep.subr.mxu0 0.0
  %298 = vmatpush2.msra.mxu0 0.0
  %299 = vmatprep.subr.mxu0 0.0
  %300 = vmatpush2.msra.mxu0 0.0
  %301 = vmatprep.subr.mxu0 0.0
  %302 = vmatpush2.msra.mxu0 0.0
  %303 = vmatprep.subr.mxu0 0.0
  %304 = vmatpush2.msra.mxu0 0.0
  %305 = vmatprep.subr.mxu0 0.0
  %306 = vmatpush2.msra.mxu0 0.0
  %307 = vmatprep.subr.mxu0 0.0
  %308 = vmatpush2.msra.mxu0 0.0
  %309 = vmatprep.subr.mxu0 0.0
  %310 = vmatpush2.msra.mxu0 0.0
  %311 = vmatprep.subr.mxu0 0.0
  %312 = vmatpush2.msra.mxu0 0.0
  %313 = vmatprep.subr.mxu0 0.0
  %314 = vmatpush2.msra.mxu0 0.0
  %315 = vmatprep.mubr.f32.mxu0 0.0
  %316 = vmatmul.mubr.f32.gmra.mxu0 %v11
  %v317 = vpop.f32.mrf.mxu0
  %v318 = vadd.f32 0.0, %v317
  %v319 = vpop.f32.mrf.mxu0
  %320 = vmatprep.mubr.f32.mxu0 0.0
  %321 = vmatmul.mubr.f32.gmra.mxu0 %v12
  %v322 = vpop.f32.mrf.mxu0
  %v323 = vadd.f32 0.0, %v322
  %v324 = vpop.f32.mrf.mxu0
  %325 = vmatprep.mubr.f32.mxu0 0.0
  %326 = vmatmul.mubr.f32.gmra.mxu0 %v13
  %v327 = vpop.f32.mrf.mxu0
  %v328 = vadd.f32 0.0, %v327
  %v329 = vpop.f32.mrf.mxu0
  %330 = vmatprep.mubr.f32.mxu0 0.0
  %331 = vmatmul.mubr.f32.gmra.mxu0 %v14
  %v332 = vpop.f32.mrf.mxu0
  %v333 = vadd.f32 0.0, %v332
  %v334 = vpop.f32.mrf.mxu0
  %335 = vmatprep.mubr.f32.mxu0 0.0
  %336 = vmatmul.mubr.f32.gmra.mxu0 %v15
  %v337 = vpop.f32.mrf.mxu0
  %v338 = vadd.f32 0.0, %v337
  %v339 = vpop.f32.mrf.mxu0
  %340 = vmatprep.mubr.f32.mxu0 0.0
  %341 = vmatmul.mubr.f32.gmra.mxu0 %v16
  %v342 = vpop.f32.mrf.mxu0
  %v343 = vadd.f32 0.0, %v342
  %v344 = vpop.f32.mrf.mxu0
  %345 = vmatprep.mubr.f32.mxu0 0.0
  %346 = vmatmul.mubr.f32.gmra.mxu0 %v17
  %v347 = vpop.f32.mrf.mxu0
  %v348 = vadd.f32 0.0, %v347
  %v349 = vpop.f32.mrf.mxu0
  %350 = vmatprep.mubr.f32.mxu0 0.0
  %351 = vmatmul.mubr.f32.gmra.mxu0 %v18
  %v352 = vpop.f32.mrf.mxu0
  %v353 = vadd.f32 0.0, %v352
  %v354 = vpop.f32.mrf.mxu0
  %355 = vmatprep.mubr.f32.mxu0 0.0
  %356 = vmatmul.mubr.f32.gmra.mxu0 %v19
  %v357 = vpop.f32.mrf.mxu0
  %v358 = vadd.f32 0.0, %v357
  %v359 = vpop.f32.mrf.mxu0
  %360 = vmatprep.mubr.f32.mxu0 0.0
  %361 = vmatmul.mubr.f32.gmra.mxu0 %v20
  %v362 = vpop.f32.mrf.mxu0
  %v363 = vadd.f32 0.0, %v362
  %v364 = vpop.f32.mrf.mxu0
  %365 = vmatprep.mubr.f32.mxu0 0.0
  %366 = vmatmul.mubr.f32.gmra.mxu0 %v21
  %v367 = vpop.f32.mrf.mxu0
  %v368 = vadd.f32 0.0, %v367
  %v369 = vpop.f32.mrf.mxu0
  %370 = vmatprep.mubr.f32.mxu0 0.0
  %371 = vmatmul.mubr.f32.gmra.mxu0 %v22
  %v372 = vpop.f32.mrf.mxu0
  %v373 = vadd.f32 0.0, %v372
  %v374 = vpop.f32.mrf.mxu0
  %375 = vmatprep.mubr.f32.mxu0 0.0
  %376 = vmatmul.mubr.f32.gmra.mxu0 %v23
  %v377 = vpop.f32.mrf.mxu0
  %v378 = vadd.f32 0.0, %v377
  %v379 = vpop.f32.mrf.mxu0
  %380 = vmatprep.mubr.f32.mxu0 0.0
  %381 = vmatmul.mubr.f32.gmra.mxu0 %v24
  %v382 = vpop.f32.mrf.mxu0
  %v383 = vadd.f32 0.0, %v382
  %v384 = vpop.f32.mrf.mxu0
  %385 = vmatprep.mubr.f32.mxu0 0.0
  %386 = vmatmul.mubr.f32.gmra.mxu0 %v25
  %v387 = vpop.f32.mrf.mxu0
  %v388 = vadd.f32 0.0, %v387
  %v389 = vpop.f32.mrf.mxu0
  %390 = vmatprep.mubr.f32.mxu0 0.0
  %391 = vmatmul.mubr.f32.gmra.mxu0 %v26
  %v392 = vpop.f32.mrf.mxu0
  %v393 = vadd.f32 0.0, %v392
  %v394 = vpop.f32.mrf.mxu0
  %395 = vdwg.mxu0
  %v396 = vmul.f32 %v318, %v204
  %v397 = vmul.f32 %v323, %v206
  %v398 = vmul.f32 %v328, %v208
  %v399 = vmul.f32 %v333, %v210
  %v400 = vmul.f32 %v338, %v212
  %v401 = vmul.f32 %v343, %v214
  %v402 = vmul.f32 %v348, %v216
  %v403 = vmul.f32 %v353, %v218
  %v404 = vmul.f32 %v358, %v220
  %v405 = vmul.f32 %v363, %v222
  %v406 = vmul.f32 %v368, %v224
  %v407 = vmul.f32 %v373, %v226
  %v408 = vmul.f32 %v378, %v228
  %v409 = vmul.f32 %v383, %v230
  %v410 = vmul.f32 %v388, %v232
  %v411 = vmul.f32 %v393, %v234
  %v412 = vadd.f32 %v396, %v235
  %v413 = vadd.f32 %v397, %v236
  %v414 = vadd.f32 %v398, %v237
  %v415 = vadd.f32 %v399, %v238
  %v416 = vadd.f32 %v400, %v239
  %v417 = vadd.f32 %v401, %v240
  %v418 = vadd.f32 %v402, %v241
  %v419 = vadd.f32 %v403, %v242
  %v420 = vadd.f32 %v404, %v243
  %v421 = vadd.f32 %v405, %v244
  %v422 = vadd.f32 %v406, %v245
  %v423 = vadd.f32 %v407, %v246
  %v424 = vadd.f32 %v408, %v247
  %v425 = vadd.f32 %v409, %v248
  %v426 = vadd.f32 %v410, %v249
  %v427 = vadd.f32 %v411, %v250
  %428 = vmatprep.subr.mxu0 0.0
  %429 = vmatpush1.msra.mxu0 %v427
  %430 = vmatprep.subr.mxu0 0.0
  %431 = vmatpush1.msra.mxu0 %v426
  %432 = vmatprep.subr.mxu0 0.0
  %433 = vmatpush1.msra.mxu0 %v425
  %434 = vmatprep.subr.mxu0 0.0
  %435 = vmatpush1.msra.mxu0 %v424
  %436 = vmatprep.subr.mxu0 0.0
  %437 = vmatpush1.msra.mxu0 %v423
  %438 = vmatprep.subr.mxu0 0.0
  %439 = vmatpush1.msra.mxu0 %v422
  %440 = vmatprep.subr.mxu0 0.0
  %441 = vmatpush1.msra.mxu0 %v421
  %442 = vmatprep.subr.mxu0 0.0
  %443 = vmatpush1.msra.mxu0 %v420
  %444 = vmatprep.subr.mxu0 0.0
  %445 = vmatpush1.msra.mxu0 %v419
  %446 = vmatprep.subr.mxu0 0.0
  %447 = vmatpush1.msra.mxu0 %v418
  %448 = vmatprep.subr.mxu0 0.0
  %449 = vmatpush1.msra.mxu0 %v417
  %450 = vmatprep.subr.mxu0 0.0
  %451 = vmatpush1.msra.mxu0 %v416
  %452 = vmatprep.subr.mxu0 0.0
  %453 = vmatpush1.msra.mxu0 %v415
  %454 = vmatprep.subr.mxu0 0.0
  %455 = vmatpush1.msra.mxu0 %v414
  %456 = vmatprep.subr.mxu0 0.0
  %457 = vmatpush1.msra.mxu0 %v413
  %458 = vmatprep.subr.mxu0 0.0
  %459 = vmatpush1.msra.mxu0 %v412
  %460 = vmatprep.subr.mxu0 0.0
  %461 = vmatpush2.msra.mxu0 0.0
  %462 = vmatprep.subr.mxu0 0.0
  %463 = vmatpush2.msra.mxu0 0.0
  %464 = vmatprep.subr.mxu0 0.0
  %465 = vmatpush2.msra.mxu0 0.0
  %466 = vmatprep.subr.mxu0 0.0
  %467 = vmatpush2.msra.mxu0 0.0
  %468 = vmatprep.subr.mxu0 0.0
  %469 = vmatpush2.msra.mxu0 0.0
  %470 = vmatprep.subr.mxu0 0.0
  %471 = vmatpush2.msra.mxu0 0.0
  %472 = vmatprep.subr.mxu0 0.0
  %473 = vmatpush2.msra.mxu0 0.0
  %474 = vmatprep.subr.mxu0 0.0
  %475 = vmatpush2.msra.mxu0 0.0
  %476 = vmatprep.subr.mxu0 0.0
  %477 = vmatpush2.msra.mxu0 0.0
  %478 = vmatprep.subr.mxu0 0.0
  %479 = vmatpush2.msra.mxu0 0.0
  %480 = vmatprep.subr.mxu0 0.0
  %481 = vmatpush2.msra.mxu0 0.0
  %482 = vmatprep.subr.mxu0 0.0
  %483 = vmatpush2.msra.mxu0 0.0
  %484 = vmatprep.subr.mxu0 0.0
  %485 = vmatpush2.msra.mxu0 0.0
  %486 = vmatprep.subr.mxu0 0.0
  %487 = vmatpush2.msra.mxu0 0.0
  %488 = vmatprep.subr.mxu0 0.0
  %489 = vmatpush2.msra.mxu0 0.0
  %490 = vmatprep.subr.mxu0 0.0
  %491 = vmatpush2.msra.mxu0 0.0
  %492 = vmatprep.mubr.f32.mxu0 0.0
  %493 = vmatmul.mubr.f32.gmra.mxu0 %v11
  %v494 = vpop.f32.mrf.mxu0
  %v495 = vadd.f32 0.0, %v494
  %v496 = vpop.f32.mrf.mxu0
  %497 = vmatprep.mubr.f32.mxu0 0.0
  %498 = vmatmul.mubr.f32.gmra.mxu0 %v12
  %v499 = vpop.f32.mrf.mxu0
  %v500 = vadd.f32 0.0, %v499
  %v501 = vpop.f32.mrf.mxu0
  %502 = vmatprep.mubr.f32.mxu0 0.0
  %503 = vmatmul.mubr.f32.gmra.mxu0 %v13
  %v504 = vpop.f32.mrf.mxu0
  %v505 = vadd.f32 0.0, %v504
  %v506 = vpop.f32.mrf.mxu0
  %507 = vmatprep.mubr.f32.mxu0 0.0
  %508 = vmatmul.mubr.f32.gmra.mxu0 %v14
  %v509 = vpop.f32.mrf.mxu0
  %v510 = vadd.f32 0.0, %v509
  %v511 = vpop.f32.mrf.mxu0
  %512 = vmatprep.mubr.f32.mxu0 0.0
  %513 = vmatmul.mubr.f32.gmra.mxu0 %v15
  %v514 = vpop.f32.mrf.mxu0
  %v515 = vadd.f32 0.0, %v514
  %v516 = vpop.f32.mrf.mxu0
  %517 = vmatprep.mubr.f32.mxu0 0.0
  %518 = vmatmul.mubr.f32.gmra.mxu0 %v16
  %v519 = vpop.f32.mrf.mxu0
  %v520 = vadd.f32 0.0, %v519
  %v521 = vpop.f32.mrf.mxu0
  %522 = vmatprep.mubr.f32.mxu0 0.0
  %523 = vmatmul.mubr.f32.gmra.mxu0 %v17
  %v524 = vpop.f32.mrf.mxu0
  %v525 = vadd.f32 0.0, %v524
  %v526 = vpop.f32.mrf.mxu0
  %527 = vmatprep.mubr.f32.mxu0 0.0
  %528 = vmatmul.mubr.f32.gmra.mxu0 %v18
  %v529 = vpop.f32.mrf.mxu0
  %v530 = vadd.f32 0.0, %v529
  %v531 = vpop.f32.mrf.mxu0
  %532 = vmatprep.mubr.f32.mxu0 0.0
  %533 = vmatmul.mubr.f32.gmra.mxu0 %v19
  %v534 = vpop.f32.mrf.mxu0
  %v535 = vadd.f32 0.0, %v534
  %v536 = vpop.f32.mrf.mxu0
  %537 = vmatprep.mubr.f32.mxu0 0.0
  %538 = vmatmul.mubr.f32.gmra.mxu0 %v20
  %v539 = vpop.f32.mrf.mxu0
  %v540 = vadd.f32 0.0, %v539
  %v541 = vpop.f32.mrf.mxu0
  %542 = vmatprep.mubr.f32.mxu0 0.0
  %543 = vmatmul.mubr.f32.gmra.mxu0 %v21
  %v544 = vpop.f32.mrf.mxu0
  %v545 = vadd.f32 0.0, %v544
  %v546 = vpop.f32.mrf.mxu0
  %547 = vmatprep.mubr.f32.mxu0 0.0
  %548 = vmatmul.mubr.f32.gmra.mxu0 %v22
  %v549 = vpop.f32.mrf.mxu0
  %v550 = vadd.f32 0.0, %v549
  %v551 = vpop.f32.mrf.mxu0
  %552 = vmatprep.mubr.f32.mxu0 0.0
  %553 = vmatmul.mubr.f32.gmra.mxu0 %v23
  %v554 = vpop.f32.mrf.mxu0
  %v555 = vadd.f32 0.0, %v554
  %v556 = vpop.f32.mrf.mxu0
  %557 = vmatprep.mubr.f32.mxu0 0.0
  %558 = vmatmul.mubr.f32.gmra.mxu0 %v24
  %v559 = vpop.f32.mrf.mxu0
  %v560 = vadd.f32 0.0, %v559
  %v561 = vpop.f32.mrf.mxu0
  %562 = vmatprep.mubr.f32.mxu0 0.0
  %563 = vmatmul.mubr.f32.gmra.mxu0 %v25
  %v564 = vpop.f32.mrf.mxu0
  %v565 = vadd.f32 0.0, %v564
  %v566 = vpop.f32.mrf.mxu0
  %567 = vmatprep.mubr.f32.mxu0 0.0
  %568 = vmatmul.mubr.f32.gmra.mxu0 %v26
  %v569 = vpop.f32.mrf.mxu0
  %v570 = vadd.f32 0.0, %v569
  %v571 = vpop.f32.mrf.mxu0
  %572 = vdwg.mxu0
  %v573 = vmul.f32 %v495, %v204
  %v574 = vmul.f32 %v500, %v206
  %v575 = vmul.f32 %v505, %v208
  %v576 = vmul.f32 %v510, %v210
  %v577 = vmul.f32 %v515, %v212
  %v578 = vmul.f32 %v520, %v214
  %v579 = vmul.f32 %v525, %v216
  %v580 = vmul.f32 %v530, %v218
  %v581 = vmul.f32 %v535, %v220
  %v582 = vmul.f32 %v540, %v222
  %v583 = vmul.f32 %v545, %v224
  %v584 = vmul.f32 %v550, %v226
  %v585 = vmul.f32 %v555, %v228
  %v586 = vmul.f32 %v560, %v230
  %v587 = vmul.f32 %v565, %v232
  %v588 = vmul.f32 %v570, %v234
  %v589 = vadd.f32 %v573, %v235
  %v590 = vadd.f32 %v574, %v236
  %v591 = vadd.f32 %v575, %v237
  %v592 = vadd.f32 %v576, %v238
  %v593 = vadd.f32 %v577, %v239
  %v594 = vadd.f32 %v578, %v240
  %v595 = vadd.f32 %v579, %v241
  %v596 = vadd.f32 %v580, %v242
  %v597 = vadd.f32 %v581, %v243
  %v598 = vadd.f32 %v582, %v244
  %v599 = vadd.f32 %v583, %v245
  %v600 = vadd.f32 %v584, %v246
  %v601 = vadd.f32 %v585, %v247
  %v602 = vadd.f32 %v586, %v248
  %v603 = vadd.f32 %v587, %v249
  %v604 = vadd.f32 %v588, %v250
  %605 = vmatprep.subr.mxu0 0.0
  %606 = vmatpush1.msra.mxu0 %v604
  %607 = vmatprep.subr.mxu0 0.0
  %608 = vmatpush1.msra.mxu0 %v603
  %609 = vmatprep.subr.mxu0 0.0
  %610 = vmatpush1.msra.mxu0 %v602
  %611 = vmatprep.subr.mxu0 0.0
  %612 = vmatpush1.msra.mxu0 %v601
  %613 = vmatprep.subr.mxu0 0.0
  %614 = vmatpush1.msra.mxu0 %v600
  %615 = vmatprep.subr.mxu0 0.0
  %616 = vmatpush1.msra.mxu0 %v599
  %617 = vmatprep.subr.mxu0 0.0
  %618 = vmatpush1.msra.mxu0 %v598
  %619 = vmatprep.subr.mxu0 0.0
  %620 = vmatpush1.msra.mxu0 %v597
  %621 = vmatprep.subr.mxu0 0.0
  %622 = vmatpush1.msra.mxu0 %v596
  %623 = vmatprep.subr.mxu0 0.0
  %624 = vmatpush1.msra.mxu0 %v595
  %625 = vmatprep.subr.mxu0 0.0
  %626 = vmatpush1.msra.mxu0 %v594
  %627 = vmatprep.subr.mxu0 0.0
  %628 = vmatpush1.msra.mxu0 %v593
  %629 = vmatprep.subr.mxu0 0.0
  %630 = vmatpush1.msra.mxu0 %v592
  %631 = vmatprep.subr.mxu0 0.0
  %632 = vmatpush1.msra.mxu0 %v591
  %633 = vmatprep.subr.mxu0 0.0
  %634 = vmatpush1.msra.mxu0 %v590
  %635 = vmatprep.subr.mxu0 0.0
  %636 = vmatpush1.msra.mxu0 %v589
  %637 = vmatprep.subr.mxu0 0.0
  %638 = vmatpush2.msra.mxu0 0.0
  %639 = vmatprep.subr.mxu0 0.0
  %640 = vmatpush2.msra.mxu0 0.0
  %641 = vmatprep.subr.mxu0 0.0
  %642 = vmatpush2.msra.mxu0 0.0
  %643 = vmatprep.subr.mxu0 0.0
  %644 = vmatpush2.msra.mxu0 0.0
  %645 = vmatprep.subr.mxu0 0.0
  %646 = vmatpush2.msra.mxu0 0.0
  %647 = vmatprep.subr.mxu0 0.0
  %648 = vmatpush2.msra.mxu0 0.0
  %649 = vmatprep.subr.mxu0 0.0
  %650 = vmatpush2.msra.mxu0 0.0
  %651 = vmatprep.subr.mxu0 0.0
  %652 = vmatpush2.msra.mxu0 0.0
  %653 = vmatprep.subr.mxu0 0.0
  %654 = vmatpush2.msra.mxu0 0.0
  %655 = vmatprep.subr.mxu0 0.0
  %656 = vmatpush2.msra.mxu0 0.0
  %657 = vmatprep.subr.mxu0 0.0
  %658 = vmatpush2.msra.mxu0 0.0
  %659 = vmatprep.subr.mxu0 0.0
  %660 = vmatpush2.msra.mxu0 0.0
  %661 = vmatprep.subr.mxu0 0.0
  %662 = vmatpush2.msra.mxu0 0.0
  %663 = vmatprep.subr.mxu0 0.0
  %664 = vmatpush2.msra.mxu0 0.0
  %665 = vmatprep.subr.mxu0 0.0
  %666 = vmatpush2.msra.mxu0 0.0
  %667 = vmatprep.subr.mxu0 0.0
  %668 = vmatpush2.msra.mxu0 0.0
  %669 = vmatprep.mubr.f32.mxu0 0.0
  %670 = vmatmul.mubr.f32.gmra.mxu0 %v11
  %v671 = vpop.f32.mrf.mxu0
  %v672 = vadd.f32 0.0, %v671
  %v673 = vpop.f32.mrf.mxu0
  %674 = vmatprep.mubr.f32.mxu0 0.0
  %675 = vmatmul.mubr.f32.gmra.mxu0 %v12
  %v676 = vpop.f32.mrf.mxu0
  %v677 = vadd.f32 0.0, %v676
  %v678 = vpop.f32.mrf.mxu0
  %679 = vmatprep.mubr.f32.mxu0 0.0
  %680 = vmatmul.mubr.f32.gmra.mxu0 %v13
  %v681 = vpop.f32.mrf.mxu0
  %v682 = vadd.f32 0.0, %v681
  %v683 = vpop.f32.mrf.mxu0
  %684 = vmatprep.mubr.f32.mxu0 0.0
  %685 = vmatmul.mubr.f32.gmra.mxu0 %v14
  %v686 = vpop.f32.mrf.mxu0
  %v687 = vadd.f32 0.0, %v686
  %v688 = vpop.f32.mrf.mxu0
  %689 = vmatprep.mubr.f32.mxu0 0.0
  %690 = vmatmul.mubr.f32.gmra.mxu0 %v15
  %v691 = vpop.f32.mrf.mxu0
  %v692 = vadd.f32 0.0, %v691
  %v693 = vpop.f32.mrf.mxu0
  %694 = vmatprep.mubr.f32.mxu0 0.0
  %695 = vmatmul.mubr.f32.gmra.mxu0 %v16
  %v696 = vpop.f32.mrf.mxu0
  %v697 = vadd.f32 0.0, %v696
  %v698 = vpop.f32.mrf.mxu0
  %699 = vmatprep.mubr.f32.mxu0 0.0
  %700 = vmatmul.mubr.f32.gmra.mxu0 %v17
  %v701 = vpop.f32.mrf.mxu0
  %v702 = vadd.f32 0.0, %v701
  %v703 = vpop.f32.mrf.mxu0
  %704 = vmatprep.mubr.f32.mxu0 0.0
  %705 = vmatmul.mubr.f32.gmra.mxu0 %v18
  %v706 = vpop.f32.mrf.mxu0
  %v707 = vadd.f32 0.0, %v706
  %v708 = vpop.f32.mrf.mxu0
  %709 = vmatprep.mubr.f32.mxu0 0.0
  %710 = vmatmul.mubr.f32.gmra.mxu0 %v19
  %v711 = vpop.f32.mrf.mxu0
  %v712 = vadd.f32 0.0, %v711
  %v713 = vpop.f32.mrf.mxu0
  %714 = vmatprep.mubr.f32.mxu0 0.0
  %715 = vmatmul.mubr.f32.gmra.mxu0 %v20
  %v716 = vpop.f32.mrf.mxu0
  %v717 = vadd.f32 0.0, %v716
  %v718 = vpop.f32.mrf.mxu0
  %719 = vmatprep.mubr.f32.mxu0 0.0
  %720 = vmatmul.mubr.f32.gmra.mxu0 %v21
  %v721 = vpop.f32.mrf.mxu0
  %v722 = vadd.f32 0.0, %v721
  %v723 = vpop.f32.mrf.mxu0
  %724 = vmatprep.mubr.f32.mxu0 0.0
  %725 = vmatmul.mubr.f32.gmra.mxu0 %v22
  %v726 = vpop.f32.mrf.mxu0
  %v727 = vadd.f32 0.0, %v726
  %v728 = vpop.f32.mrf.mxu0
  %729 = vmatprep.mubr.f32.mxu0 0.0
  %730 = vmatmul.mubr.f32.gmra.mxu0 %v23
  %v731 = vpop.f32.mrf.mxu0
  %v732 = vadd.f32 0.0, %v731
  %v733 = vpop.f32.mrf.mxu0
  %734 = vmatprep.mubr.f32.mxu0 0.0
  %735 = vmatmul.mubr.f32.gmra.mxu0 %v24
  %v736 = vpop.f32.mrf.mxu0
  %v737 = vadd.f32 0.0, %v736
  %v738 = vpop.f32.mrf.mxu0
  %739 = vmatprep.mubr.f32.mxu0 0.0
  %740 = vmatmul.mubr.f32.gmra.mxu0 %v25
  %v741 = vpop.f32.mrf.mxu0
  %v742 = vadd.f32 0.0, %v741
  %v743 = vpop.f32.mrf.mxu0
  %744 = vmatprep.mubr.f32.mxu0 0.0
  %745 = vmatmul.mubr.f32.gmra.mxu0 %v26
  %v746 = vpop.f32.mrf.mxu0
  %v747 = vadd.f32 0.0, %v746
  %v748 = vpop.f32.mrf.mxu0
  %749 = vdwg.mxu0
  %v750 = vmul.f32 %v672, %v204
  %v751 = vmul.f32 %v677, %v206
  %v752 = vmul.f32 %v682, %v208
  %v753 = vmul.f32 %v687, %v210
  %v754 = vmul.f32 %v692, %v212
  %v755 = vmul.f32 %v697, %v214
  %v756 = vmul.f32 %v702, %v216
  %v757 = vmul.f32 %v707, %v218
  %v758 = vmul.f32 %v712, %v220
  %v759 = vmul.f32 %v717, %v222
  %v760 = vmul.f32 %v722, %v224
  %v761 = vmul.f32 %v727, %v226
  %v762 = vmul.f32 %v732, %v228
  %v763 = vmul.f32 %v737, %v230
  %v764 = vmul.f32 %v742, %v232
  %v765 = vmul.f32 %v747, %v234
  %v766 = vadd.f32 %v750, %v235
  %v767 = vadd.f32 %v751, %v236
  %v768 = vadd.f32 %v752, %v237
  %v769 = vadd.f32 %v753, %v238
  %v770 = vadd.f32 %v754, %v239
  %v771 = vadd.f32 %v755, %v240
  %v772 = vadd.f32 %v756, %v241
  %v773 = vadd.f32 %v757, %v242
  %v774 = vadd.f32 %v758, %v243
  %v775 = vadd.f32 %v759, %v244
  %v776 = vadd.f32 %v760, %v245
  %v777 = vadd.f32 %v761, %v246
  %v778 = vadd.f32 %v762, %v247
  %v779 = vadd.f32 %v763, %v248
  %v780 = vadd.f32 %v764, %v249
  %v781 = vadd.f32 %v765, %v250
  %782 = vst [vmem:[%s2] sm:$0xff] %v766
  %783 = vst [vmem:[%s2 + $0x8] sm:$0xff] %v767
  %784 = vst [vmem:[%s2 + $0x10] sm:$0xff] %v768
  %785 = vst [vmem:[%s2 + $0x18] sm:$0xff] %v769
  %786 = vst [vmem:[%s2 + $0x20] sm:$0xff] %v770
  %787 = vst [vmem:[%s2 + $0x28] sm:$0xff] %v771
  %788 = vst [vmem:[%s2 + $0x30] sm:$0xff] %v772
  %789 = vst [vmem:[%s2 + $0x38] sm:$0xff] %v773
  %790 = vst [vmem:[%s2 + $0x40] sm:$0xff] %v774
  %791 = vst [vmem:[%s2 + $0x48] sm:$0xff] %v775
  %792 = vst [vmem:[%s2 + $0x50] sm:$0xff] %v776
  %793 = vst [vmem:[%s2 + $0x58] sm:$0xff] %v777
  %794 = vst [vmem:[%s2 + $0x60] sm:$0xff] %v778
  %795 = vst [vmem:[%s2 + $0x68] sm:$0xff] %v779
  %796 = vst [vmem:[%s2 + $0x70] sm:$0xff] %v780
  %797 = vst [vmem:[%s2 + $0x78] sm:$0xff] %v781
  // Predicated region
  $region10: #{_gcn_recovery_impl.1} parent=0 // pred_check
    _
  $region11: #{_gcn_recovery_impl.1} parent=0 // pred_check_branch
    %799 = sbr.rel (0) target = $region13
  $region12: #{_gcn_recovery_impl.1} parent=0 // pred_region
    _
  $region13: #{_gcn_recovery_impl.1} parent=0 // pred_fallthru
    _
  // Predicated region
  $region14: #{_gcn_recovery_impl.1} parent=0 // pred_check
    _
  $region15: #{_gcn_recovery_impl.1} parent=0 // pred_check_branch
    %801 = sbr.rel (0) target = $region17
  $region16: #{_gcn_recovery_impl.1} parent=0 // pred_region
    _
  $region17: #{_gcn_recovery_impl.1} parent=0 // pred_fallthru
    _

</llo_original>
